<compile_context>
chip_gen: v5e
topology: v5e:2x2
jax: 0.10.0
libtpu: 0.0.40
codegen_flags: <defaults>
</compile_context>

<pallas_src>
import functools
import math

import jax
import jax.numpy as jnp
from jax.experimental import pallas as pl
from jax.experimental.pallas import tpu as pltpu


def _mha_kernel(x_ref, w3_ref, b3_ref, wo_ref, bo_ref, o_ref, *, num_heads, head_dim):
    nh, D = num_heads, head_dim
    S = x_ref.shape[1]
    H = x_ref.shape[2]

    # x block: (1, S, H) -> broadcast the slab across the head-batch dim (cheap, hoisted).
    x = jnp.broadcast_to(x_ref[...], (nh, S, H))

    # Fused, head-batched Q/K/V projection (single batched MXU contraction):
    #   qkv[h, s, :] = x[s, :] @ [Wq_h*scale | Wk_h | Wv_h] + [bq_h*scale | bk_h | bv_h]
    qkv = jnp.einsum("nsh,nhf->nsf", x, w3_ref[...],
                     preferred_element_type=jnp.float32) + b3_ref[...]   # (nh, S, 3D)

    q = qkv[:, :, :D]            # (nh, S, D)  -- already scaled by 1/sqrt(D)
    k = qkv[:, :, D:2 * D]       # (nh, S, D)
    v = qkv[:, :, 2 * D:]        # (nh, S, D)

    # Head-batched scaled dot-product attention.
    scores = jnp.einsum("nsd,ntd->nst", q, k,
                        preferred_element_type=jnp.float32)              # (nh, S, S)
    scores = scores - jnp.max(scores, axis=-1, keepdims=True)
    p = jnp.exp(scores)
    denom = jnp.sum(p, axis=-1, keepdims=True)
    p = p * pl.reciprocal(denom, approx=True)                            # EUP vrcp
    attn = jnp.einsum("nst,ntd->nsd", p, v,
                      preferred_element_type=jnp.float32)                # (nh, S, D)

    # Output projection with the head merge folded in:
    #   out = sum_h attn[h] @ Wo[h*D:(h+1)*D, :] + bo
    out = jnp.einsum("nsd,ndh->nsh", attn, wo_ref[...],
                     preferred_element_type=jnp.float32)                 # (nh, S, H)
    out = jnp.sum(out, axis=0) + bo_ref[...]                             # (S, H)
    o_ref[0] = out.astype(o_ref.dtype)


def multihead_attention(x, params, *, num_heads):
    """x: (B, S, H) float32.  params: dict of torch-convention Linear params."""
    B, S, H = x.shape
    D = H // num_heads
    scale = 1.0 / math.sqrt(D)

    # torch nn.Linear computes x @ W.T + b; pre-transpose to (in, out) on the host.
    wq_t = params["wq"].T * scale        # fold 1/sqrt(D) into the Q projection
    wk_t = params["wk"].T
    wv_t = params["wv"].T
    wo_t = params["wo"].T
    bq = params["bq"] * scale
    bk = params["bk"]
    bv = params["bv"]
    bo = params["bo"].reshape(1, H)

    def per_head(w):                     # (H, H) -> (nh, H, D): head h's output columns
        return w.reshape(H, num_heads, D).transpose(1, 0, 2)

    # Fused per-head QKV weight/bias: (nh, H, 3D) / (nh, 1, 3D).
    w3 = jnp.concatenate([per_head(wq_t), per_head(wk_t), per_head(wv_t)], axis=-1)
    b3 = jnp.concatenate([bq.reshape(num_heads, 1, D),
                          bk.reshape(num_heads, 1, D),
                          bv.reshape(num_heads, 1, D)], axis=-1)
    # Output projection split per head: (nh, D, H).
    wo_h = wo_t.reshape(num_heads, D, H)

    kernel = functools.partial(_mha_kernel, num_heads=num_heads, head_dim=D)

    return pl.pallas_call(
        kernel,
        out_shape=jax.ShapeDtypeStruct((B, S, H), x.dtype),
        grid_spec=pltpu.PrefetchScalarGridSpec(
            num_scalar_prefetch=0,
            grid=(B,),
            in_specs=[
                pl.BlockSpec((1, S, H), lambda b: (b, 0, 0)),               # x slab
                pl.BlockSpec((num_heads, H, 3 * D), lambda b: (0, 0, 0)),   # fused QKV W
                pl.BlockSpec((num_heads, 1, 3 * D), lambda b: (0, 0, 0)),   # fused QKV b
                pl.BlockSpec((num_heads, D, H), lambda b: (0, 0, 0)),       # out-proj W (per head)
                pl.BlockSpec((1, H), lambda b: (0, 0)),                     # out-proj b
            ],
            out_specs=pl.BlockSpec((1, S, H), lambda b: (b, 0, 0)),
        ),
        compiler_params=pltpu.CompilerParams(
            dimension_semantics=("parallel",)),   # B-way parallel -> feeds both v7x TCs
    )(x, w3, b3, wo_h, bo)


def _reference(x, params, *, num_heads):
    """Pure-JAX reference mirroring the PyTorch forward exactly."""
    B, S, H = x.shape
    D = H // num_heads
    q = x @ params["wq"].T + params["bq"]
    k = x @ params["wk"].T + params["bk"]
    v = x @ params["wv"].T + params["bv"]
    q = q.reshape(B, S, num_heads, D).transpose(0, 2, 1, 3)
    k = k.reshape(B, S, num_heads, D).transpose(0, 2, 1, 3)
    v = v.reshape(B, S, num_heads, D).transpose(0, 2, 1, 3)
    scores = jnp.einsum("bhqd,bhkd->bhqk", q, k) / math.sqrt(D)
    attn_w = jax.nn.softmax(scores, axis=-1)
    attn = jnp.einsum("bhqk,bhkd->bhqd", attn_w, v)
    attn = attn.transpose(0, 2, 1, 3).reshape(B, S, H)
    return attn @ params["wo"].T + params["bo"]


if __name__ == "__main__":
    B, S, H = 2, 8, 32
    NUM_HEADS = 4

    key = jax.random.PRNGKey(0)
    keys = jax.random.split(key, 9)

    # Deterministic synthetic parameters (torch nn.Linear shapes: W=(out,in), b=(out,))
    scale = 1.0 / math.sqrt(H)
    params = {
        "wq": jax.random.uniform(keys[0], (H, H), jnp.float32, -scale, scale),
        "bq": jax.random.uniform(keys[1], (H,), jnp.float32, -scale, scale),
        "wk": jax.random.uniform(keys[2], (H, H), jnp.float32, -scale, scale),
        "bk": jax.random.uniform(keys[3], (H,), jnp.float32, -scale, scale),
        "wv": jax.random.uniform(keys[4], (H, H), jnp.float32, -scale, scale),
        "bv": jax.random.uniform(keys[5], (H,), jnp.float32, -scale, scale),
        "wo": jax.random.uniform(keys[6], (H, H), jnp.float32, -scale, scale),
        "bo": jax.random.uniform(keys[7], (H,), jnp.float32, -scale, scale),
    }

    x = jax.random.normal(keys[8], (B, S, H), jnp.float32)

    out = multihead_attention(x, params, num_heads=NUM_HEADS)
    out = jax.block_until_ready(out)

    ref = _reference(x, params, num_heads=NUM_HEADS)
    assert out.shape == (B, S, H)
    # Tolerance loosened slightly vs 1e-5 because of pl.reciprocal(approx=True) in softmax.
    assert jnp.allclose(out, ref, atol=5e-3, rtol=5e-3), "Pallas output mismatch vs reference"

    print("KERNEL_OK")
</pallas_src>

<mosaic_0001>
module attributes {stable_mosaic.version = 11 : i64} {
  func.func @_mha_kernel(%arg0: i32, %arg1: memref<1x8x32xf32, #tpu.memory_space<vmem>>, %arg2: memref<4x32x24xf32, #tpu.memory_space<vmem>>, %arg3: memref<4x1x24xf32, #tpu.memory_space<vmem>>, %arg4: memref<4x8x32xf32, #tpu.memory_space<vmem>>, %arg5: memref<1x32xf32, #tpu.memory_space<vmem>>, %arg6: memref<1x8x32xf32, #tpu.memory_space<vmem>>) attributes {dimension_semantics = [#tpu.dimension_semantics<parallel>], iteration_bounds = array<i64: 2>, scalar_prefetch = 0 : i64, scratch_operands = 0 : i64, tpu.core_type = #tpu.core_type<tc>, window_params = [{transform_indices = @transform_0, window_bounds = array<i64: 1, 8, 32>}, {pipeline_mode = #tpu.pipeline_mode<synchronous>, transform_indices = @transform_1, window_bounds = array<i64: 4, 32, 24>}, {pipeline_mode = #tpu.pipeline_mode<synchronous>, transform_indices = @transform_2, window_bounds = array<i64: 4, 1, 24>}, {pipeline_mode = #tpu.pipeline_mode<synchronous>, transform_indices = @transform_3, window_bounds = array<i64: 4, 8, 32>}, {pipeline_mode = #tpu.pipeline_mode<synchronous>, transform_indices = @transform_4, window_bounds = array<i64: 1, 32>}, {transform_indices = @transform_5, window_bounds = array<i64: 1, 8, 32>}]} {
    %c0 = arith.constant 0 : index
    %c0_0 = arith.constant 0 : index
    %c0_1 = arith.constant 0 : index
    %0 = vector.load %arg1[%c0, %c0_0, %c0_1] : memref<1x8x32xf32, #tpu.memory_space<vmem>>, vector<1x8x32xf32>
    %1 = vector.shape_cast %0 : vector<1x8x32xf32> to vector<1x8x32xf32>
    %2 = vector.broadcast %1 : vector<1x8x32xf32> to vector<4x8x32xf32>
    %c0_2 = arith.constant 0 : index
    %c0_3 = arith.constant 0 : index
    %c0_4 = arith.constant 0 : index
    %3 = vector.load %arg2[%c0_2, %c0_3, %c0_4] : memref<4x32x24xf32, #tpu.memory_space<vmem>>, vector<4x32x24xf32>
    "tpu.trace_start"() <{level = 10 : i32, message = "nsh,nhf->nsf"}> : () -> ()
    %cst = arith.constant dense<0.000000e+00> : vector<4x8x24xf32>
    %4 = tpu.matmul %2, %3, %cst {dimension_numbers = #tpu.dot_dimension_numbers<[2], [1], [1], [2], [0, 0, 0, 1, 1, 2], [0], [0]>} : vector<4x8x32xf32>, vector<4x32x24xf32>, vector<4x8x24xf32> -> vector<4x8x24xf32>
    "tpu.trace_stop"() : () -> ()
    %c0_5 = arith.constant 0 : index
    %c0_6 = arith.constant 0 : index
    %c0_7 = arith.constant 0 : index
    %5 = vector.load %arg3[%c0_5, %c0_6, %c0_7] : memref<4x1x24xf32, #tpu.memory_space<vmem>>, vector<4x1x24xf32>
    %6 = vector.broadcast %5 : vector<4x1x24xf32> to vector<4x8x24xf32>
    %7 = arith.addf %4, %6 : vector<4x8x24xf32>
    %8 = vector.extract_strided_slice %7 {offsets = [0, 0, 0], sizes = [4, 8, 8], strides = [1, 1, 1]} : vector<4x8x24xf32> to vector<4x8x8xf32>
    %9 = vector.extract_strided_slice %7 {offsets = [0, 0, 8], sizes = [4, 8, 8], strides = [1, 1, 1]} : vector<4x8x24xf32> to vector<4x8x8xf32>
    %10 = vector.extract_strided_slice %7 {offsets = [0, 0, 16], sizes = [4, 8, 8], strides = [1, 1, 1]} : vector<4x8x24xf32> to vector<4x8x8xf32>
    "tpu.trace_start"() <{level = 10 : i32, message = "nsd,ntd->nst"}> : () -> ()
    %cst_8 = arith.constant dense<0.000000e+00> : vector<4x8x8xf32>
    %11 = tpu.matmul %8, %9, %cst_8 {dimension_numbers = #tpu.dot_dimension_numbers<[2], [2], [1], [1], [0, 0, 0, 1, 1, 1], [0], [0]>} : vector<4x8x8xf32>, vector<4x8x8xf32>, vector<4x8x8xf32> -> vector<4x8x8xf32>
    "tpu.trace_stop"() : () -> ()
    %cst_9 = arith.constant dense<0xFF800000> : vector<4x8xf32>
    %12 = vector.multi_reduction <maximumf>, %11, %cst_9 [2] : vector<4x8x8xf32> to vector<4x8xf32>
    %13 = vector.shape_cast %12 : vector<4x8xf32> to vector<4x8x1xf32>
    %14 = vector.broadcast %13 : vector<4x8x1xf32> to vector<4x8x8xf32>
    %15 = arith.subf %11, %14 : vector<4x8x8xf32>
    %16 = math.exp %15 : vector<4x8x8xf32>
    %cst_10 = arith.constant dense<0.000000e+00> : vector<4x8xf32>
    %17 = vector.multi_reduction <add>, %16, %cst_10 [2] : vector<4x8x8xf32> to vector<4x8xf32>
    %18 = vector.shape_cast %17 : vector<4x8xf32> to vector<4x8x1xf32>
    %19 = tpu.reciprocal %18 {approx = true} : vector<4x8x1xf32> -> vector<4x8x1xf32>
    %20 = vector.broadcast %19 : vector<4x8x1xf32> to vector<4x8x8xf32>
    %21 = arith.mulf %16, %20 : vector<4x8x8xf32>
    "tpu.trace_start"() <{level = 10 : i32, message = "nst,ntd->nsd"}> : () -> ()
    %cst_11 = arith.constant dense<0.000000e+00> : vector<4x8x8xf32>
    %22 = tpu.matmul %21, %10, %cst_11 {dimension_numbers = #tpu.dot_dimension_numbers<[2], [1], [1], [2], [0, 0, 0, 1, 1, 2], [0], [0]>} : vector<4x8x8xf32>, vector<4x8x8xf32>, vector<4x8x8xf32> -> vector<4x8x8xf32>
    "tpu.trace_stop"() : () -> ()
    %c0_12 = arith.constant 0 : index
    %c0_13 = arith.constant 0 : index
    %c0_14 = arith.constant 0 : index
    %23 = vector.load %arg4[%c0_12, %c0_13, %c0_14] : memref<4x8x32xf32, #tpu.memory_space<vmem>>, vector<4x8x32xf32>
    "tpu.trace_start"() <{level = 10 : i32, message = "nsd,ndh->nsh"}> : () -> ()
    %cst_15 = arith.constant dense<0.000000e+00> : vector<4x8x32xf32>
    %24 = tpu.matmul %22, %23, %cst_15 {dimension_numbers = #tpu.dot_dimension_numbers<[2], [1], [1], [2], [0, 0, 0, 1, 1, 2], [0], [0]>} : vector<4x8x8xf32>, vector<4x8x32xf32>, vector<4x8x32xf32> -> vector<4x8x32xf32>
    "tpu.trace_stop"() : () -> ()
    %cst_16 = arith.constant dense<0.000000e+00> : vector<8x32xf32>
    %25 = vector.multi_reduction <add>, %24, %cst_16 [0] : vector<4x8x32xf32> to vector<8x32xf32>
    %c0_17 = arith.constant 0 : index
    %c0_18 = arith.constant 0 : index
    %26 = vector.load %arg5[%c0_17, %c0_18] : memref<1x32xf32, #tpu.memory_space<vmem>>, vector<1x32xf32>
    %27 = vector.broadcast %26 : vector<1x32xf32> to vector<8x32xf32>
    %28 = arith.addf %25, %27 : vector<8x32xf32>
    %c0_19 = arith.constant 0 : index
    %c0_20 = arith.constant 0 : index
    %c0_21 = arith.constant 0 : index
    %29 = vector.load %arg6[%c0_19, %c0_20, %c0_21] : memref<1x8x32xf32, #tpu.memory_space<vmem>>, vector<1x8x32xf32>
    %30 = vector.shape_cast %29 : vector<1x8x32xf32> to vector<8x32xf32>
    %31 = vector.shape_cast %28 : vector<8x32xf32> to vector<1x8x32xf32>
    tpu.vector_store %arg6[%c0_19, %c0_20, %c0_21], %31 {strides = array<i32>} : memref<1x8x32xf32, #tpu.memory_space<vmem>>, vector<1x8x32xf32>,
    return
  }
  func.func @transform_0(%arg0: i32) -> (i32, i32, i32) {
    %c0_i32 = arith.constant 0 : i32
    %c0_i32_0 = arith.constant 0 : i32
    %c0_i32_1 = arith.constant 0 : i32
    return %arg0, %c0_i32, %c0_i32_0 : i32, i32, i32
  }
  func.func @transform_1(%arg0: i32) -> (i32, i32, i32) {
    %c0_i32 = arith.constant 0 : i32
    %c0_i32_0 = arith.constant 0 : i32
    %c0_i32_1 = arith.constant 0 : i32
    %c0_i32_2 = arith.constant 0 : i32
    return %c0_i32, %c0_i32_0, %c0_i32_1 : i32, i32, i32
  }
  func.func @transform_2(%arg0: i32) -> (i32, i32, i32) {
    %c0_i32 = arith.constant 0 : i32
    %c0_i32_0 = arith.constant 0 : i32
    %c0_i32_1 = arith.constant 0 : i32
    %c0_i32_2 = arith.constant 0 : i32
    return %c0_i32, %c0_i32_0, %c0_i32_1 : i32, i32, i32
  }
  func.func @transform_3(%arg0: i32) -> (i32, i32, i32) {
    %c0_i32 = arith.constant 0 : i32
    %c0_i32_0 = arith.constant 0 : i32
    %c0_i32_1 = arith.constant 0 : i32
    %c0_i32_2 = arith.constant 0 : i32
    return %c0_i32, %c0_i32_0, %c0_i32_1 : i32, i32, i32
  }
  func.func @transform_4(%arg0: i32) -> (i32, i32) {
    %c0_i32 = arith.constant 0 : i32
    %c0_i32_0 = arith.constant 0 : i32
    %c0_i32_1 = arith.constant 0 : i32
    return %c0_i32, %c0_i32_0 : i32, i32
  }
  func.func @transform_5(%arg0: i32) -> (i32, i32, i32) {
    %c0_i32 = arith.constant 0 : i32
    %c0_i32_0 = arith.constant 0 : i32
    %c0_i32_1 = arith.constant 0 : i32
    return %arg0, %c0_i32, %c0_i32_0 : i32, i32, i32
  }
}

</mosaic_0001>

<llo_original>
// kernel: tpu_custom_call.1
$region0: #{tpu_custom_call.1}
  #allocation0 [shape = 'u32[]', space=smem, size = 0x4, offset = 0x4, fixed_abs, tag = 'smem constant byte address 0x4 - core index']
  #allocation1 [shape = 'u32[72,128]{1,0:T(1,128)}', space=vmem, size = 0x9000, scoped, tag = 'internal scratch']
  %s0 = inlined_call_operand.vmem [shape: f32[2,8,32], index: 0, kind: input, shape index: {}]
  %s1 = inlined_call_operand.vmem [shape: f32[4,32,24], index: 1, kind: input, shape index: {}]
  %s2 = inlined_call_operand.vmem [shape: f32[4,1,24], index: 2, kind: input, shape index: {}]
  %s3 = inlined_call_operand.vmem [shape: f32[4,8,32], index: 3, kind: input, shape index: {}]
  %s4 = inlined_call_operand.vmem [shape: f32[1,32], index: 4, kind: input, shape index: {}]
  %s5 = inlined_call_operand.hbm [shape: f32[2,8,32], index: 5, kind: output, shape index: {}]
  %s6 = sld [smem:[#allocation0]]
  $region53: #{tpu_custom_call.1} parent=0
    _
  %s8 = ssub.s32 1, %s6
  %s9 = scalar_select 0, %s8, %s6
  $region1: #{tpu_custom_call.1} parent=0
    #allocation2 [shape = 'u8[8192]{0}', space=vmem, size = 0x2000, scoped, tag = 'output window, operand 0']
    #allocation3 [shape = 's32[2]{0}', space=sflag, size = 0x8, scoped, tag = 'scoped memory for tpu_custom_call.1']
    %10 = vsyncpa [#allocation3], 0
    %s11 = scalar_lea.sflag [#allocation3], 1
    %12 = vsyncpa %s11, 0
    loop: start=0, step=1, limit=4
    $region2: #{tpu_custom_call.1} parent=1 // loop_pre_header
      _
    $region3: #{tpu_custom_call.1} parent=1 // loop_header
      %s14 = sphi 0, %s18
      %p15 = scmp.ge.s32.totalorder %s14, 4
      %s24 = sphi 0, %s26
      %s27 = sphi 0, %s24
      %s28 = sphi 0, %s27
      %s44 = sphi 0, %s28
      %s48 = sphi 0, %s48
      %s50 = sphi 0, %s48
      %s51 = sphi 0, %s50
      %s65 = sphi 0, %s51
      %s69 = sphi 0, %s69
      %s71 = sphi 0, %s69
      %s72 = sphi 0, %s71
      %s86 = sphi 0, %s72
      %s90 = sphi 0, %s90
      %s92 = sphi 0, %s90
      %s93 = sphi 0, %s92
      %s107 = sphi 0, %s93
      %s111 = sphi 0, %s111
      %s113 = sphi 0, %s111
      %s114 = sphi 0, %s113
      %s128 = sphi 0, %s114
      %s134 = sphi 0, %s136
      %s137 = sphi 0, %s134
      %s138 = sphi 0, %s137
      %s154 = sphi 0, %s138
    $region4: #{tpu_custom_call.1} parent=1 // loop_header_branch
      %17 = sbr.rel (%p15) target = $region8
    $region5: #{tpu_custom_call.1} parent=1 // loop_body
      %s19 = ssub.s32 %s14, 1
      %s20 = ssub.s32 %s14, 2
      %s21 = sadd.s32 %s14, 1
      %s22 = ssub.s32 %s14, %s21
      %p23 = scmp.eq.s32.totalorder %s22, 0
      %s25 = sadd.s32 %s24, 1
      %s26 = scalar_select %p23, %s24, %s25
      %p29 = pneg %p23
      %p30 = scmp.eq.s32.totalorder %s14, 1
      %p31 = por %p29, %p30
      %p32 = scmp.ne.s32.totalorder %s24, %s27
      %p33 = scmp.eq.s32.totalorder %s14, 0
      %p34 = por %p32, %p33
      %p35 = scmp.ne.s32.totalorder %s24, %s27
      %p36 = scmp.eq.s32.totalorder %s19, 1
      %p37 = por %p35, %p36
      %p38 = scmp.ne.s32.totalorder %s27, %s28
      %p39 = scmp.eq.s32.totalorder %s19, 0
      %p40 = por %p38, %p39
      %p41 = scmp.ne.s32.totalorder %s27, %s28
      %p42 = scmp.eq.s32.totalorder %s20, 1
      %p43 = por %p41, %p42
      %p45 = scmp.ne.s32.totalorder %s28, %s44
      %p46 = scmp.eq.s32.totalorder %s20, 0
      %p47 = por %p45, %p46
      %s49 = sadd.s32 %s48, 1
      %p52 = scmp.eq.s32.totalorder %s14, 1
      %p53 = scmp.ne.s32.totalorder %s48, %s50
      %p54 = scmp.eq.s32.totalorder %s14, 0
      %p55 = por %p53, %p54
      %p56 = scmp.ne.s32.totalorder %s48, %s50
      %p57 = scmp.eq.s32.totalorder %s19, 1
      %p58 = por %p56, %p57
      %p59 = scmp.ne.s32.totalorder %s50, %s51
      %p60 = scmp.eq.s32.totalorder %s19, 0
      %p61 = por %p59, %p60
      %p62 = scmp.ne.s32.totalorder %s50, %s51
      %p63 = scmp.eq.s32.totalorder %s20, 1
      %p64 = por %p62, %p63
      %p66 = scmp.ne.s32.totalorder %s51, %s65
      %p67 = scmp.eq.s32.totalorder %s20, 0
      %p68 = por %p66, %p67
      %s70 = sadd.s32 %s69, 1
      %p73 = scmp.eq.s32.totalorder %s14, 1
      %p74 = scmp.ne.s32.totalorder %s69, %s71
      %p75 = scmp.eq.s32.totalorder %s14, 0
      %p76 = por %p74, %p75
      %p77 = scmp.ne.s32.totalorder %s69, %s71
      %p78 = scmp.eq.s32.totalorder %s19, 1
      %p79 = por %p77, %p78
      %p80 = scmp.ne.s32.totalorder %s71, %s72
      %p81 = scmp.eq.s32.totalorder %s19, 0
      %p82 = por %p80, %p81
      %p83 = scmp.ne.s32.totalorder %s71, %s72
      %p84 = scmp.eq.s32.totalorder %s20, 1
      %p85 = por %p83, %p84
      %p87 = scmp.ne.s32.totalorder %s72, %s86
      %p88 = scmp.eq.s32.totalorder %s20, 0
      %p89 = por %p87, %p88
      %s91 = sadd.s32 %s90, 1
      %p94 = scmp.eq.s32.totalorder %s14, 1
      %p95 = scmp.ne.s32.totalorder %s90, %s92
      %p96 = scmp.eq.s32.totalorder %s14, 0
      %p97 = por %p95, %p96
      %p98 = scmp.ne.s32.totalorder %s90, %s92
      %p99 = scmp.eq.s32.totalorder %s19, 1
      %p100 = por %p98, %p99
      %p101 = scmp.ne.s32.totalorder %s92, %s93
      %p102 = scmp.eq.s32.totalorder %s19, 0
      %p103 = por %p101, %p102
      %p104 = scmp.ne.s32.totalorder %s92, %s93
      %p105 = scmp.eq.s32.totalorder %s20, 1
      %p106 = por %p104, %p105
      %p108 = scmp.ne.s32.totalorder %s93, %s107
      %p109 = scmp.eq.s32.totalorder %s20, 0
      %p110 = por %p108, %p109
      %s112 = sadd.s32 %s111, 1
      %p115 = scmp.eq.s32.totalorder %s14, 1
      %p116 = scmp.ne.s32.totalorder %s111, %s113
      %p117 = scmp.eq.s32.totalorder %s14, 0
      %p118 = por %p116, %p117
      %p119 = scmp.ne.s32.totalorder %s111, %s113
      %p120 = scmp.eq.s32.totalorder %s19, 1
      %p121 = por %p119, %p120
      %p122 = scmp.ne.s32.totalorder %s113, %s114
      %p123 = scmp.eq.s32.totalorder %s19, 0
      %p124 = por %p122, %p123
      %p125 = scmp.ne.s32.totalorder %s113, %s114
      %p126 = scmp.eq.s32.totalorder %s20, 1
      %p127 = por %p125, %p126
      %p129 = scmp.ne.s32.totalorder %s114, %s128
      %p130 = scmp.eq.s32.totalorder %s20, 0
      %p131 = por %p129, %p130
      %s132 = ssub.s32 %s14, %s21
      %p133 = scmp.eq.s32.totalorder %s132, 0
      %s135 = sadd.s32 %s134, 1
      %s136 = scalar_select %p133, %s134, %s135
      %p139 = pneg %p133
      %p140 = scmp.eq.s32.totalorder %s14, 1
      %p141 = por %p139, %p140
      %p142 = scmp.ne.s32.totalorder %s134, %s137
      %p143 = scmp.eq.s32.totalorder %s14, 0
      %p144 = por %p142, %p143
      %p145 = scmp.ne.s32.totalorder %s134, %s137
      %p146 = scmp.eq.s32.totalorder %s19, 1
      %p147 = por %p145, %p146
      %p148 = scmp.ne.s32.totalorder %s137, %s138
      %p149 = scmp.eq.s32.totalorder %s19, 0
      %p150 = por %p148, %p149
      %p151 = scmp.ne.s32.totalorder %s137, %s138
      %p152 = scmp.eq.s32.totalorder %s20, 1
      %p153 = por %p151, %p152
      %p155 = scmp.ne.s32.totalorder %s138, %s154
      %p156 = scmp.eq.s32.totalorder %s20, 0
      %p157 = por %p155, %p156
      %p158 = scmp.le.s32.totalorder 1, %s14
      %p159 = scmp.lt.s32.totalorder %s14, 3
      %p160 = pnand %p158, %p159
      %p161 = pneg %p160
      // Predicated region
      $region9: #{tpu_custom_call.1} parent=5 // pred_check
        _
      $region10: #{tpu_custom_call.1} parent=5 // pred_check_branch
        %163 = sbr.rel (%p160) target = $region12
      $region11: #{tpu_custom_call.1} parent=5 // pred_region
        %s164 = ssub.s32 %s14, 1
        // Predicated region
        $region13: #{tpu_custom_call.1} parent=11 // pred_check
          %p165 = pneg %p61
        $region14: #{tpu_custom_call.1} parent=11 // pred_check_branch
          %167 = sbr.rel (%p165) target = $region16
        $region15: #{tpu_custom_call.1} parent=11 // pred_region
          _
        $region16: #{tpu_custom_call.1} parent=11 // pred_fallthru
          _
        // Predicated region
        $region17: #{tpu_custom_call.1} parent=11 // pred_check
          %p168 = pneg %p82
        $region18: #{tpu_custom_call.1} parent=11 // pred_check_branch
          %170 = sbr.rel (%p168) target = $region20
        $region19: #{tpu_custom_call.1} parent=11 // pred_region
          _
        $region20: #{tpu_custom_call.1} parent=11 // pred_fallthru
          _
        // Predicated region
        $region21: #{tpu_custom_call.1} parent=11 // pred_check
          %p171 = pneg %p103
        $region22: #{tpu_custom_call.1} parent=11 // pred_check_branch
          %173 = sbr.rel (%p171) target = $region24
        $region23: #{tpu_custom_call.1} parent=11 // pred_region
          _
        $region24: #{tpu_custom_call.1} parent=11 // pred_fallthru
          _
        // Predicated region
        $region25: #{tpu_custom_call.1} parent=11 // pred_check
          %p174 = pneg %p124
        $region26: #{tpu_custom_call.1} parent=11 // pred_check_branch
          %176 = sbr.rel (%p174) target = $region28
        $region27: #{tpu_custom_call.1} parent=11 // pred_region
          _
        $region28: #{tpu_custom_call.1} parent=11 // pred_fallthru
          _
      $region12: #{tpu_custom_call.1} parent=5 // pred_fallthru
        _
      %p177 = scmp.lt.s32.totalorder %s14, 2
      // Predicated region
      $region29: #{tpu_custom_call.1} parent=5 // pred_check
        %p178 = pneg %p177
      $region30: #{tpu_custom_call.1} parent=5 // pred_check_branch
        %180 = sbr.rel (%p178) target = $region32
      $region31: #{tpu_custom_call.1} parent=5 // pred_region
        // Predicated region
        $region33: #{tpu_custom_call.1} parent=31 // pred_check
          %p181 = pneg %p34
        $region34: #{tpu_custom_call.1} parent=31 // pred_check_branch
          %183 = sbr.rel (%p181) target = $region36
        $region35: #{tpu_custom_call.1} parent=31 // pred_region
          %p184 = scmp.lt.s32.totalorder %s14, 1
          %s185 = scalar_select %p184, %s14, 1
          %s186 = smul.addr %s185, 8
          %s187 = scalar_lea.vmem %s0, %s186
        $region36: #{tpu_custom_call.1} parent=31 // pred_fallthru
          _
      $region32: #{tpu_custom_call.1} parent=5 // pred_fallthru
        _
      %p188 = scmp.le.s32.totalorder 1, %s14
      %p189 = scmp.lt.s32.totalorder %s14, 3
      %p190 = pnand %p188, %p189
      %p191 = pneg %p190
      // Predicated region
      $region37: #{tpu_custom_call.1} parent=5 // pred_check
        _
      $region38: #{tpu_custom_call.1} parent=5 // pred_check_branch
        %193 = sbr.rel (%p190) target = $region40
      $region39: #{tpu_custom_call.1} parent=5 // pred_region
        %s194 = ssub.s32 %s14, 1
        %p195 = scmp.lt.s32.totalorder %s19, 1
        %s196 = scalar_select %p195, %s19, 1
        %s197 = smul.addr %s196, 8
        %s198 = scalar_lea.vmem %s0, %s197
        %p199 = pneg %p40
        %p200 = pneg %p37
        %p201 = pneg %p61
        %p202 = pneg %p58
        %p203 = pneg %p82
        %p204 = pneg %p79
        %p205 = pneg %p103
        %p206 = pneg %p100
        %p207 = pneg %p124
        %p208 = pneg %p121
        %p209 = pneg %p150
        %p210 = pneg %p147
        %s211 = sand.u32 %s137, 1
        %s212 = scalar_lea.sflag [#allocation3], %s211
        %s213 = sand.u32 %s137, 1
        %s214 = smul.addr %s213, 8
        %s215 = scalar_lea.vmem [#allocation2], %s214
        %p216 = scmp.lt.s32.totalorder %s19, 1
        %s217 = scalar_select %p216, %s19, 1
        %s218 = smul.addr %s217, 8
        %s219 = scalar_lea.vmem %s0, %s218
        %v220 = vld [vmem:[%s219] sm:$0xff]
        %v221 = vld [vmem:[%s1] sm:$0xff]
        %v222 = vld [vmem:[%s1 + $0x8] sm:$0xff]
        %v223 = vld [vmem:[%s1 + $0x10] sm:$0xff]
        %v224 = vld [vmem:[%s1 + $0x18] sm:$0xff]
        %v225 = vld [vmem:[%s1 + $0x20] sm:$0xff]
        %v226 = vld [vmem:[%s1 + $0x28] sm:$0xff]
        %v227 = vld [vmem:[%s1 + $0x30] sm:$0xff]
        %v228 = vld [vmem:[%s1 + $0x38] sm:$0xff]
        %v229 = vld [vmem:[%s1 + $0x40] sm:$0xff]
        %v230 = vld [vmem:[%s1 + $0x48] sm:$0xff]
        %v231 = vld [vmem:[%s1 + $0x50] sm:$0xff]
        %v232 = vld [vmem:[%s1 + $0x58] sm:$0xff]
        %v233 = vld [vmem:[%s1 + $0x60] sm:$0xff]
        %v234 = vld [vmem:[%s1 + $0x68] sm:$0xff]
        %v235 = vld [vmem:[%s1 + $0x70] sm:$0xff]
        %v236 = vld [vmem:[%s1 + $0x78] sm:$0xff]
        %v237 = vld [vmem:[%s2] sm:$0x1]
        %v238 = vld [vmem:[%s2 + $0x1] sm:$0x1]
        %v239 = vld [vmem:[%s2 + $0x2] sm:$0x1]
        %v240 = vld [vmem:[%s2 + $0x3] sm:$0x1]
        %v245 = vperm.slane %v237, 0
        %v246 = vperm.slane %v238, 0
        %v247 = vperm.slane %v239, 0
        %v248 = vperm.slane %v240, 0
        %vm253 = vcmask 261120
        %v255 = vsel %vm253, %v220, 0
        %257 = vmatpush.msra.mxu0 0.0
        %258 = vmatpush.msra.mxu0 0.0
        %259 = vmatpush.msra.mxu0 0.0
        %260 = vmatpush.msra.mxu0 0.0
        %261 = vmatpush.msra.mxu0 0.0
        %262 = vmatpush.msra.mxu0 0.0
        %263 = vmatpush.msra.mxu0 0.0
        %264 = vmatpush.msra.mxu0 0.0
        %265 = vmatpush.msra.mxu0 0.0
        %266 = vmatpush.msra.mxu0 0.0
        %267 = vmatpush.msra.mxu0 0.0
        %268 = vmatpush.msra.mxu0 0.0
        %269 = vmatpush.msra.mxu0 %v224
        %270 = vmatpush.msra.mxu0 %v223
        %271 = vmatpush.msra.mxu0 %v222
        %272 = vmatpush.msra.mxu0 %v221
        %273 = vmatmul.f32.gmra.mxu0 %v255
        %v274 = vpop.f32.mrf.mxu0
        %v275 = vadd.f32 %v245, %v274
        %276 = vdwg.mxu0
        %277 = vmatpush.msra.mxu0 0.0
        %278 = vmatpush.msra.mxu0 0.0
        %279 = vmatpush.msra.mxu0 0.0
        %280 = vmatpush.msra.mxu0 0.0
        %281 = vmatpush.msra.mxu0 0.0
        %282 = vmatpush.msra.mxu0 0.0
        %283 = vmatpush.msra.mxu0 0.0
        %284 = vmatpush.msra.mxu0 0.0
        %285 = vmatpush.msra.mxu0 0.0
        %286 = vmatpush.msra.mxu0 0.0
        %287 = vmatpush.msra.mxu0 0.0
        %288 = vmatpush.msra.mxu0 0.0
        %289 = vmatpush.msra.mxu0 %v228
        %290 = vmatpush.msra.mxu0 %v227
        %291 = vmatpush.msra.mxu0 %v226
        %292 = vmatpush.msra.mxu0 %v225
        %293 = vmatmul.f32.gmra.mxu0 %v255
        %v294 = vpop.f32.mrf.mxu0
        %v295 = vadd.f32 %v246, %v294
        %296 = vdwg.mxu0
        %297 = vmatpush.msra.mxu0 0.0
        %298 = vmatpush.msra.mxu0 0.0
        %299 = vmatpush.msra.mxu0 0.0
        %300 = vmatpush.msra.mxu0 0.0
        %301 = vmatpush.msra.mxu0 0.0
        %302 = vmatpush.msra.mxu0 0.0
        %303 = vmatpush.msra.mxu0 0.0
        %304 = vmatpush.msra.mxu0 0.0
        %305 = vmatpush.msra.mxu0 0.0
        %306 = vmatpush.msra.mxu0 0.0
        %307 = vmatpush.msra.mxu0 0.0
        %308 = vmatpush.msra.mxu0 0.0
        %309 = vmatpush.msra.mxu0 %v232
        %310 = vmatpush.msra.mxu0 %v231
        %311 = vmatpush.msra.mxu0 %v230
        %312 = vmatpush.msra.mxu0 %v229
        %313 = vmatmul.f32.gmra.mxu0 %v255
        %v314 = vpop.f32.mrf.mxu0
        %v315 = vadd.f32 %v247, %v314
        %316 = vdwg.mxu0
        %317 = vmatpush.msra.mxu0 0.0
        %318 = vmatpush.msra.mxu0 0.0
        %319 = vmatpush.msra.mxu0 0.0
        %320 = vmatpush.msra.mxu0 0.0
        %321 = vmatpush.msra.mxu0 0.0
        %322 = vmatpush.msra.mxu0 0.0
        %323 = vmatpush.msra.mxu0 0.0
        %324 = vmatpush.msra.mxu0 0.0
        %325 = vmatpush.msra.mxu0 0.0
        %326 = vmatpush.msra.mxu0 0.0
        %327 = vmatpush.msra.mxu0 0.0
        %328 = vmatpush.msra.mxu0 0.0
        %329 = vmatpush.msra.mxu0 %v236
        %330 = vmatpush.msra.mxu0 %v235
        %331 = vmatpush.msra.mxu0 %v234
        %332 = vmatpush.msra.mxu0 %v233
        %333 = vmatmul.f32.gmra.mxu0 %v255
        %v334 = vpop.f32.mrf.mxu0
        %v335 = vadd.f32 %v248, %v334
        %336 = vdwg.mxu0
        %338 = vrot.lane.b32.xlu0 %v275, 120
        %v339 = vpop.permute.xlu0 %338
        %vm340 = vcmask 64512
        %v341 = vsel %vm340, %v275, 0
        %v343 = vsel %vm340, %v339, 0
        %345 = vmatpush.xpose.msra.mxu0 0.0
        %346 = vmatpush.xpose.msra.mxu0 0.0
        %347 = vmatpush.xpose.msra.mxu0 0.0
        %348 = vmatpush.xpose.msra.mxu0 0.0
        %349 = vmatpush.xpose.msra.mxu0 0.0
        %350 = vmatpush.xpose.msra.mxu0 0.0
        %351 = vmatpush.xpose.msra.mxu0 0.0
        %352 = vmatpush.xpose.msra.mxu0 0.0
        %353 = vmatpush.xpose.msra.mxu0 0.0
        %354 = vmatpush.xpose.msra.mxu0 0.0
        %355 = vmatpush.xpose.msra.mxu0 0.0
        %356 = vmatpush.xpose.msra.mxu0 0.0
        %357 = vmatpush.xpose.msra.mxu0 0.0
        %358 = vmatpush.xpose.msra.mxu0 0.0
        %359 = vmatpush.xpose.msra.mxu0 0.0
        %360 = vmatpush.xpose.msra.mxu0 %v343
        %361 = vmatmul.f32.gmra.mxu0 %v341
        %v362 = vpop.f32.mrf.mxu0
        %v363 = vadd.f32 0.0, %v362
        %364 = vdwg.mxu0
        %366 = vrot.lane.b32.xlu0 %v295, 120
        %v367 = vpop.permute.xlu0 %366
        %v368 = vsel %vm340, %v295, 0
        %v370 = vsel %vm340, %v367, 0
        %372 = vmatpush.xpose.msra.mxu0 0.0
        %373 = vmatpush.xpose.msra.mxu0 0.0
        %374 = vmatpush.xpose.msra.mxu0 0.0
        %375 = vmatpush.xpose.msra.mxu0 0.0
        %376 = vmatpush.xpose.msra.mxu0 0.0
        %377 = vmatpush.xpose.msra.mxu0 0.0
        %378 = vmatpush.xpose.msra.mxu0 0.0
        %379 = vmatpush.xpose.msra.mxu0 0.0
        %380 = vmatpush.xpose.msra.mxu0 0.0
        %381 = vmatpush.xpose.msra.mxu0 0.0
        %382 = vmatpush.xpose.msra.mxu0 0.0
        %383 = vmatpush.xpose.msra.mxu0 0.0
        %384 = vmatpush.xpose.msra.mxu0 0.0
        %385 = vmatpush.xpose.msra.mxu0 0.0
        %386 = vmatpush.xpose.msra.mxu0 0.0
        %387 = vmatpush.xpose.msra.mxu0 %v370
        %388 = vmatmul.f32.gmra.mxu0 %v368
        %v389 = vpop.f32.mrf.mxu0
        %v390 = vadd.f32 0.0, %v389
        %391 = vdwg.mxu0
        %393 = vrot.lane.b32.xlu0 %v315, 120
        %v394 = vpop.permute.xlu0 %393
        %v395 = vsel %vm340, %v315, 0
        %v397 = vsel %vm340, %v394, 0
        %399 = vmatpush.xpose.msra.mxu0 0.0
        %400 = vmatpush.xpose.msra.mxu0 0.0
        %401 = vmatpush.xpose.msra.mxu0 0.0
        %402 = vmatpush.xpose.msra.mxu0 0.0
        %403 = vmatpush.xpose.msra.mxu0 0.0
        %404 = vmatpush.xpose.msra.mxu0 0.0
        %405 = vmatpush.xpose.msra.mxu0 0.0
        %406 = vmatpush.xpose.msra.mxu0 0.0
        %407 = vmatpush.xpose.msra.mxu0 0.0
        %408 = vmatpush.xpose.msra.mxu0 0.0
        %409 = vmatpush.xpose.msra.mxu0 0.0
        %410 = vmatpush.xpose.msra.mxu0 0.0
        %411 = vmatpush.xpose.msra.mxu0 0.0
        %412 = vmatpush.xpose.msra.mxu0 0.0
        %413 = vmatpush.xpose.msra.mxu0 0.0
        %414 = vmatpush.xpose.msra.mxu0 %v397
        %415 = vmatmul.f32.gmra.mxu0 %v395
        %v416 = vpop.f32.mrf.mxu0
        %v417 = vadd.f32 0.0, %v416
        %418 = vdwg.mxu0
        %420 = vrot.lane.b32.xlu0 %v335, 120
        %v421 = vpop.permute.xlu0 %420
        %v422 = vsel %vm340, %v335, 0
        %v424 = vsel %vm340, %v421, 0
        %426 = vmatpush.xpose.msra.mxu0 0.0
        %427 = vmatpush.xpose.msra.mxu0 0.0
        %428 = vmatpush.xpose.msra.mxu0 0.0
        %429 = vmatpush.xpose.msra.mxu0 0.0
        %430 = vmatpush.xpose.msra.mxu0 0.0
        %431 = vmatpush.xpose.msra.mxu0 0.0
        %432 = vmatpush.xpose.msra.mxu0 0.0
        %433 = vmatpush.xpose.msra.mxu0 0.0
        %434 = vmatpush.xpose.msra.mxu0 0.0
        %435 = vmatpush.xpose.msra.mxu0 0.0
        %436 = vmatpush.xpose.msra.mxu0 0.0
        %437 = vmatpush.xpose.msra.mxu0 0.0
        %438 = vmatpush.xpose.msra.mxu0 0.0
        %439 = vmatpush.xpose.msra.mxu0 0.0
        %440 = vmatpush.xpose.msra.mxu0 0.0
        %441 = vmatpush.xpose.msra.mxu0 %v424
        %442 = vmatmul.f32.gmra.mxu0 %v422
        %v443 = vpop.f32.mrf.mxu0
        %v444 = vadd.f32 0.0, %v443
        %445 = vdwg.mxu0
        %v446 = vsel %vm340, %v363, -inf
        %447 = vmax.xlane.f32.xlu0 %v446
        %v448 = vpop.xlane.xlu0 %447
        %v449 = vsel %vm340, %v390, -inf
        %450 = vmax.xlane.f32.xlu0 %v449
        %v451 = vpop.xlane.xlu0 %450
        %v452 = vsel %vm340, %v417, -inf
        %453 = vmax.xlane.f32.xlu0 %v452
        %v454 = vpop.xlane.xlu0 %453
        %v455 = vsel %vm340, %v444, -inf
        %456 = vmax.xlane.f32.xlu0 %v455
        %v457 = vpop.xlane.xlu0 %456
        %v458 = vsub.f32 %v363, %v448
        %v459 = vsub.f32 %v390, %v451
        %v460 = vsub.f32 %v417, %v454
        %v461 = vsub.f32 %v444, %v457
        %v462 = vmul.f32 %v458, 1.442695
        %v463 = vpow.pop %v462
        %v464 = vmul.f32 %v459, 1.442695
        %v465 = vpow.pop %v464
        %v466 = vmul.f32 %v460, 1.442695
        %v467 = vpow.pop %v466
        %v468 = vmul.f32 %v461, 1.442695
        %v469 = vpow.pop %v468
        %v470 = vsel %vm340, %v463, 0.0
        %471 = vadd.xlane.f32.xlu0 %v470
        %v472 = vpop.xlane.xlu0 %471
        %v473 = vsel %vm340, %v465, 0.0
        %474 = vadd.xlane.f32.xlu0 %v473
        %v475 = vpop.xlane.xlu0 %474
        %v476 = vsel %vm340, %v467, 0.0
        %477 = vadd.xlane.f32.xlu0 %v476
        %v478 = vpop.xlane.xlu0 %477
        %v479 = vsel %vm340, %v469, 0.0
        %480 = vadd.xlane.f32.xlu0 %v479
        %v481 = vpop.xlane.xlu0 %480
        %v482 = vrcp.pop %v472
        %v483 = vrcp.pop %v475
        %v484 = vrcp.pop %v478
        %v485 = vrcp.pop %v481
        %v486 = vmul.f32 %v463, %v482
        %v487 = vmul.f32 %v465, %v483
        %v488 = vmul.f32 %v467, %v484
        %v489 = vmul.f32 %v469, %v485
        %490 = vrot.lane.b32.xlu0 %v275, 112
        %v491 = vpop.permute.xlu0 %490
        %v494 = vsel %vm340, %v486, 0
        %496 = vmatpush.msra.mxu0 0.0
        %497 = vmatpush.msra.mxu0 0.0
        %498 = vmatpush.msra.mxu0 0.0
        %499 = vmatpush.msra.mxu0 0.0
        %500 = vmatpush.msra.mxu0 0.0
        %501 = vmatpush.msra.mxu0 0.0
        %502 = vmatpush.msra.mxu0 0.0
        %503 = vmatpush.msra.mxu0 0.0
        %504 = vmatpush.msra.mxu0 0.0
        %505 = vmatpush.msra.mxu0 0.0
        %506 = vmatpush.msra.mxu0 0.0
        %507 = vmatpush.msra.mxu0 0.0
        %508 = vmatpush.msra.mxu0 0.0
        %509 = vmatpush.msra.mxu0 0.0
        %510 = vmatpush.msra.mxu0 0.0
        %511 = vmatpush.msra.mxu0 %v491
        %512 = vmatmul.f32.gmra.mxu0 %v494
        %v513 = vpop.f32.mrf.mxu0
        %v514 = vadd.f32 0.0, %v513
        %515 = vdwg.mxu0
        %516 = vrot.lane.b32.xlu0 %v295, 112
        %v517 = vpop.permute.xlu0 %516
        %v520 = vsel %vm340, %v487, 0
        %522 = vmatpush.msra.mxu0 0.0
        %523 = vmatpush.msra.mxu0 0.0
        %524 = vmatpush.msra.mxu0 0.0
        %525 = vmatpush.msra.mxu0 0.0
        %526 = vmatpush.msra.mxu0 0.0
        %527 = vmatpush.msra.mxu0 0.0
        %528 = vmatpush.msra.mxu0 0.0
        %529 = vmatpush.msra.mxu0 0.0
        %530 = vmatpush.msra.mxu0 0.0
        %531 = vmatpush.msra.mxu0 0.0
        %532 = vmatpush.msra.mxu0 0.0
        %533 = vmatpush.msra.mxu0 0.0
        %534 = vmatpush.msra.mxu0 0.0
        %535 = vmatpush.msra.mxu0 0.0
        %536 = vmatpush.msra.mxu0 0.0
        %537 = vmatpush.msra.mxu0 %v517
        %538 = vmatmul.f32.gmra.mxu0 %v520
        %v539 = vpop.f32.mrf.mxu0
        %v540 = vadd.f32 0.0, %v539
        %541 = vdwg.mxu0
        %542 = vrot.lane.b32.xlu0 %v315, 112
        %v543 = vpop.permute.xlu0 %542
        %v546 = vsel %vm340, %v488, 0
        %548 = vmatpush.msra.mxu0 0.0
        %549 = vmatpush.msra.mxu0 0.0
        %550 = vmatpush.msra.mxu0 0.0
        %551 = vmatpush.msra.mxu0 0.0
        %552 = vmatpush.msra.mxu0 0.0
        %553 = vmatpush.msra.mxu0 0.0
        %554 = vmatpush.msra.mxu0 0.0
        %555 = vmatpush.msra.mxu0 0.0
        %556 = vmatpush.msra.mxu0 0.0
        %557 = vmatpush.msra.mxu0 0.0
        %558 = vmatpush.msra.mxu0 0.0
        %559 = vmatpush.msra.mxu0 0.0
        %560 = vmatpush.msra.mxu0 0.0
        %561 = vmatpush.msra.mxu0 0.0
        %562 = vmatpush.msra.mxu0 0.0
        %563 = vmatpush.msra.mxu0 %v543
        %564 = vmatmul.f32.gmra.mxu0 %v546
        %v565 = vpop.f32.mrf.mxu0
        %v566 = vadd.f32 0.0, %v565
        %567 = vdwg.mxu0
        %568 = vrot.lane.b32.xlu0 %v335, 112
        %v569 = vpop.permute.xlu0 %568
        %v572 = vsel %vm340, %v489, 0
        %574 = vmatpush.msra.mxu0 0.0
        %575 = vmatpush.msra.mxu0 0.0
        %576 = vmatpush.msra.mxu0 0.0
        %577 = vmatpush.msra.mxu0 0.0
        %578 = vmatpush.msra.mxu0 0.0
        %579 = vmatpush.msra.mxu0 0.0
        %580 = vmatpush.msra.mxu0 0.0
        %581 = vmatpush.msra.mxu0 0.0
        %582 = vmatpush.msra.mxu0 0.0
        %583 = vmatpush.msra.mxu0 0.0
        %584 = vmatpush.msra.mxu0 0.0
        %585 = vmatpush.msra.mxu0 0.0
        %586 = vmatpush.msra.mxu0 0.0
        %587 = vmatpush.msra.mxu0 0.0
        %588 = vmatpush.msra.mxu0 0.0
        %589 = vmatpush.msra.mxu0 %v569
        %590 = vmatmul.f32.gmra.mxu0 %v572
        %v591 = vpop.f32.mrf.mxu0
        %v592 = vadd.f32 0.0, %v591
        %593 = vdwg.mxu0
        %v594 = vld [vmem:[%s3] sm:$0xff]
        %v595 = vld [vmem:[%s3 + $0x8] sm:$0xff]
        %v596 = vld [vmem:[%s3 + $0x10] sm:$0xff]
        %v597 = vld [vmem:[%s3 + $0x18] sm:$0xff]
        %v599 = vsel %vm340, %v514, 0
        %601 = vmatpush.msra.mxu0 0.0
        %602 = vmatpush.msra.mxu0 0.0
        %603 = vmatpush.msra.mxu0 0.0
        %604 = vmatpush.msra.mxu0 0.0
        %605 = vmatpush.msra.mxu0 0.0
        %606 = vmatpush.msra.mxu0 0.0
        %607 = vmatpush.msra.mxu0 0.0
        %608 = vmatpush.msra.mxu0 0.0
        %609 = vmatpush.msra.mxu0 0.0
        %610 = vmatpush.msra.mxu0 0.0
        %611 = vmatpush.msra.mxu0 0.0
        %612 = vmatpush.msra.mxu0 0.0
        %613 = vmatpush.msra.mxu0 0.0
        %614 = vmatpush.msra.mxu0 0.0
        %615 = vmatpush.msra.mxu0 0.0
        %616 = vmatpush.msra.mxu0 %v594
        %617 = vmatmul.f32.gmra.mxu0 %v599
        %v618 = vpop.f32.mrf.mxu0
        %v619 = vadd.f32 0.0, %v618
        %620 = vdwg.mxu0
        %v622 = vsel %vm340, %v540, 0
        %624 = vmatpush.msra.mxu0 0.0
        %625 = vmatpush.msra.mxu0 0.0
        %626 = vmatpush.msra.mxu0 0.0
        %627 = vmatpush.msra.mxu0 0.0
        %628 = vmatpush.msra.mxu0 0.0
        %629 = vmatpush.msra.mxu0 0.0
        %630 = vmatpush.msra.mxu0 0.0
        %631 = vmatpush.msra.mxu0 0.0
        %632 = vmatpush.msra.mxu0 0.0
        %633 = vmatpush.msra.mxu0 0.0
        %634 = vmatpush.msra.mxu0 0.0
        %635 = vmatpush.msra.mxu0 0.0
        %636 = vmatpush.msra.mxu0 0.0
        %637 = vmatpush.msra.mxu0 0.0
        %638 = vmatpush.msra.mxu0 0.0
        %639 = vmatpush.msra.mxu0 %v595
        %640 = vmatmul.f32.gmra.mxu0 %v622
        %v641 = vpop.f32.mrf.mxu0
        %v642 = vadd.f32 0.0, %v641
        %643 = vdwg.mxu0
        %v645 = vsel %vm340, %v566, 0
        %647 = vmatpush.msra.mxu0 0.0
        %648 = vmatpush.msra.mxu0 0.0
        %649 = vmatpush.msra.mxu0 0.0
        %650 = vmatpush.msra.mxu0 0.0
        %651 = vmatpush.msra.mxu0 0.0
        %652 = vmatpush.msra.mxu0 0.0
        %653 = vmatpush.msra.mxu0 0.0
        %654 = vmatpush.msra.mxu0 0.0
        %655 = vmatpush.msra.mxu0 0.0
        %656 = vmatpush.msra.mxu0 0.0
        %657 = vmatpush.msra.mxu0 0.0
        %658 = vmatpush.msra.mxu0 0.0
        %659 = vmatpush.msra.mxu0 0.0
        %660 = vmatpush.msra.mxu0 0.0
        %661 = vmatpush.msra.mxu0 0.0
        %662 = vmatpush.msra.mxu0 %v596
        %663 = vmatmul.f32.gmra.mxu0 %v645
        %v664 = vpop.f32.mrf.mxu0
        %v665 = vadd.f32 0.0, %v664
        %666 = vdwg.mxu0
        %v668 = vsel %vm340, %v592, 0
        %670 = vmatpush.msra.mxu0 0.0
        %671 = vmatpush.msra.mxu0 0.0
        %672 = vmatpush.msra.mxu0 0.0
        %673 = vmatpush.msra.mxu0 0.0
        %674 = vmatpush.msra.mxu0 0.0
        %675 = vmatpush.msra.mxu0 0.0
        %676 = vmatpush.msra.mxu0 0.0
        %677 = vmatpush.msra.mxu0 0.0
        %678 = vmatpush.msra.mxu0 0.0
        %679 = vmatpush.msra.mxu0 0.0
        %680 = vmatpush.msra.mxu0 0.0
        %681 = vmatpush.msra.mxu0 0.0
        %682 = vmatpush.msra.mxu0 0.0
        %683 = vmatpush.msra.mxu0 0.0
        %684 = vmatpush.msra.mxu0 0.0
        %685 = vmatpush.msra.mxu0 %v597
        %686 = vmatmul.f32.gmra.mxu0 %v668
        %v687 = vpop.f32.mrf.mxu0
        %v688 = vadd.f32 0.0, %v687
        %689 = vdwg.mxu0
        %v690 = vsel %vm253, %v619, 0.0
        %v691 = vsel %vm253, %v642, 0.0
        %v692 = vadd.f32 %v690, %v691
        %v693 = vsel %vm253, %v665, 0.0
        %v694 = vadd.f32 %v692, %v693
        %v695 = vsel %vm253, %v688, 0.0
        %v696 = vadd.f32 %v694, %v695
        %v697 = vld [vmem:[%s4] sm:$0x1]
        %v699 = vperm.slane %v697, 0
        %v701 = vadd.f32 %v696, %v699
        %702 = vst.msk [vmem:[%s215] sm:$0xff] %vm253, %v701
        %s703 = sand.u32 %s137, 1
        %s704 = scalar_lea.sflag [#allocation3], %s703
        %s705 = sand.u32 %s137, 1
        %s706 = smul.addr %s705, 8
        %s707 = scalar_lea.vmem [#allocation2], %s706
        // Predicated region
        $region41: #{tpu_custom_call.1} parent=39 // pred_check
          %p708 = pneg %p147
        $region42: #{tpu_custom_call.1} parent=39 // pred_check_branch
          %710 = sbr.rel (%p708) target = $region44
        $region43: #{tpu_custom_call.1} parent=39 // pred_region
          %712 = vsyncadd %s704, 0
          %s713 = smul.addr %s19, 8
          %s714 = scalar_lea.hbm %s5, %s713
          %s716 = sshll.u32 %s707, 4
          %s717 = int_to_ptr.vmem [resolvable:$true] %s716
          %s718 = sshll.u32 %s714, 4
          %s719 = int_to_ptr.hbm [resolvable:$true] %s718
          %721 = dma.vmem_to_hbm [thread:$0]  %s717, 128, %s719, %s704
        $region44: #{tpu_custom_call.1} parent=39 // pred_fallthru
          _
      $region40: #{tpu_custom_call.1} parent=5 // pred_fallthru
        _
      %p722 = scmp.le.s32.totalorder 2, %s14
      // Predicated region
      $region45: #{tpu_custom_call.1} parent=5 // pred_check
        %p723 = pneg %p722
      $region46: #{tpu_custom_call.1} parent=5 // pred_check_branch
        %725 = sbr.rel (%p723) target = $region48
      $region47: #{tpu_custom_call.1} parent=5 // pred_region
        %s726 = ssub.s32 %s14, 2
        // Predicated region
        $region49: #{tpu_custom_call.1} parent=47 // pred_check
          %p727 = pneg %p153
        $region50: #{tpu_custom_call.1} parent=47 // pred_check_branch
          %729 = sbr.rel (%p727) target = $region52
        $region51: #{tpu_custom_call.1} parent=47 // pred_region
          %s730 = sand.u32 %s138, 1
          %s731 = scalar_lea.sflag [#allocation3], %s730
          %s732 = sand.u32 %s138, 1
          %s733 = smul.addr %s732, 8
          %s734 = scalar_lea.vmem [#allocation2], %s733
          %736 = dma.done %s731, 128
        $region52: #{tpu_custom_call.1} parent=47 // pred_fallthru
          _
      $region48: #{tpu_custom_call.1} parent=5 // pred_fallthru
        _
    $region6: #{tpu_custom_call.1} parent=1 // loop_footer
      %s18 = sadd.s32 1, %s14
    $region7: #{tpu_custom_call.1} parent=1 // loop_footer_branch
      %13 = sbr.rel target = $region3
    $region8: #{tpu_custom_call.1} parent=1 // loop_exit
      _
    %737 = vsyncpa [#allocation3], 1
    %s738 = scalar_lea.sflag [#allocation3], 1
    %739 = vsyncpa %s738, 1

</llo_original>
